<compile_context>
chip_gen: v6e
topology: v6e:2x2x1
jax: 0.10.0
libtpu: 0.0.40
codegen_flags: <defaults>
</compile_context>

<pallas_src>
import math
import jax
import jax.numpy as jnp
from jax.experimental import pallas as pl
from jax.experimental.pallas import tpu as pltpu


def _round_up(n: int, m: int) -> int:
    return ((n + m - 1) // m) * m


# ---------------------------------------------------------------------------
# Kernel: one grid step == one GRU time step + decoder Linear.
# PyTorch GRU gate order (r, z, n):
#   r  = sigmoid(x W_ir + b_ir + h W_hr + b_hr)
#   z  = sigmoid(x W_iz + b_iz + h W_hz + b_hz)
#   n  = tanh   (x W_in + b_in + r * (h W_hn + b_hn))
#   h' = (1 - z) * n + z * h
#   logits = h' W_dec + b_dec
# The x-path terms (incl. folded biases) come pre-computed from gx_table.
# ---------------------------------------------------------------------------
def gru_seq_kernel(ids_ref,                      # SMEM (T, Bp) int32 (prefetch)
                   gxtab_ref,                    # VMEM (Vp, 1, 3Hp) f32, resident
                   h0_ref,                       # VMEM (Bp, Hp) f32, resident
                   wh_ref,                       # VMEM (Hp, 3Hp) bf16, resident
                   bhn_ref,                      # VMEM (1, Hp) f32, resident
                   wd_ref,                       # VMEM (Hp, Op) bf16, resident
                   bd_ref,                       # VMEM (1, Op) f32, resident
                   out_ref,                      # VMEM (Bp, Op) f32 (this step)
                   hlast_ref,                    # VMEM (Bp, Hp) f32, resident
                   h_scr):                       # VMEM scratch (Bp, Hp) f32
    t = pl.program_id(0)
    Bp, Hp = h_scr.shape

    @pl.when(t == 0)
    def _():
        h_scr[...] = h0_ref[...]

    # x path: gather precomputed gx rows (emb@W_x + folded biases) for this
    # step's tokens from the VMEM-resident table via scalar-prefetched ids.
    gx = jnp.concatenate(
        [gxtab_ref[ids_ref[t, b]] for b in range(Bp)], axis=0)    # (Bp, 3Hp) f32

    h = h_scr[...]                                                # (Bp, Hp) f32
    gh = jnp.dot(h.astype(jnp.bfloat16), wh_ref[...],
                 preferred_element_type=jnp.float32)              # (Bp, 3Hp) f32

    # r / z gates (their biases are pre-folded into gx_table); lane-aligned slices.
    rz = jax.nn.sigmoid(gx[:, :2 * Hp] + gh[:, :2 * Hp])
    r = rz[:, :Hp]
    z = rz[:, Hp:]

    # n gate: b_hn must stay inside the r * (.) product (PyTorch semantics).
    n = jnp.tanh(gx[:, 2 * Hp:] + r * (gh[:, 2 * Hp:] + bhn_ref[...]))

    h_new = (1.0 - z) * n + z * h

    h_scr[...] = h_new
    hlast_ref[...] = h_new        # constant index map -> written to HBM once

    out_ref[...] = (jnp.dot(h_new.astype(jnp.bfloat16), wd_ref[...],
                            preferred_element_type=jnp.float32) + bd_ref[...])


# ---------------------------------------------------------------------------
# Parameters: PyTorch-equivalent logical params, stored pre-transposed,
# gate-fused, zero-padded to (8,128)-friendly sizes; x path folded into a table.
# ---------------------------------------------------------------------------
def init_params(key, input_size, hidden_size, output_size):
    H, O, V = hidden_size, output_size, input_size
    Hp, Op = _round_up(H, 128), _round_up(O, 128)
    Vp = _round_up(V, 8)
    bound = 1.0 / math.sqrt(H)
    ks = jax.random.split(key, 15)

    def u(k, shape):
        return jax.random.uniform(k, shape, jnp.float32, -bound, bound)

    def pad2(a, rows, cols):
        return jnp.pad(a, ((0, rows - a.shape[0]), (0, cols - a.shape[1])))

    # Logical GRU weights, stored transposed as (in_features, out_features).
    w_ir, w_iz, w_in = u(ks[1], (H, H)), u(ks[2], (H, H)), u(ks[3], (H, H))
    w_hr, w_hz, w_hn = u(ks[4], (H, H)), u(ks[5], (H, H)), u(ks[6], (H, H))
    b_ir, b_iz, b_in = u(ks[7], (1, H)), u(ks[8], (1, H)), u(ks[9], (1, H))
    b_hr, b_hz, b_hn = u(ks[10], (1, H)), u(ks[11], (1, H)), u(ks[12], (1, H))
    w_dec, b_dec = u(ks[13], (H, O)), u(ks[14], (1, O))
    emb = jax.random.normal(ks[0], (V, H), jnp.float32)   # nn.Embedding: N(0,1)

    # x-path slab (only used to build the table) + folded biases.
    w_x = jnp.concatenate(
        [pad2(w_ir, Hp, Hp), pad2(w_iz, Hp, Hp), pad2(w_in, Hp, Hp)], axis=1)
    b_fold = jnp.concatenate(
        [pad2(b_ir + b_hr, 1, Hp), pad2(b_iz + b_hz, 1, Hp), pad2(b_in, 1, Hp)],
        axis=1)
    emb_p = pad2(emb, Vp, Hp)
    # gx_table[v] = emb[v] @ [W_ir|W_iz|W_in] + (b_ir+b_hr | b_iz+b_hz | b_in)
    gx_table = (emb_p @ w_x + b_fold).reshape(Vp, 1, 3 * Hp)      # f32

    # h-path slab, per-gate blocks padded to Hp columns so gate slices stay
    # 128-aligned inside the kernel.
    w_h = jnp.concatenate(
        [pad2(w_hr, Hp, Hp), pad2(w_hz, Hp, Hp), pad2(w_hn, Hp, Hp)], axis=1)

    return {
        "hidden_size": H,
        "output_size": O,
        "gx_table": gx_table,                                    # (Vp,1,3Hp) f32
        "w_h": w_h.astype(jnp.bfloat16),                         # (Hp,3Hp) bf16
        "b_hn": pad2(b_hn, 1, Hp),                               # (1,Hp)   f32
        "w_dec": pad2(w_dec, Hp, Op).astype(jnp.bfloat16),       # (Hp,Op)  bf16
        "b_dec": pad2(b_dec, 1, Op),                             # (1,Op)   f32
    }


# ---------------------------------------------------------------------------
# Sequence forward: time loop lives inside the kernel (grid=(T,)).
#   token_seq: int32 (T, B)
#   hidden   : f32 (1, B, H)
#   returns  : (logits (T, B, O) f32, new_hidden (1, B, H) f32)
# ---------------------------------------------------------------------------
def rnn_forward_seq(params, token_seq, hidden):
    H = params["hidden_size"]
    O = params["output_size"]
    Hp = params["w_h"].shape[0]
    Op = params["b_dec"].shape[-1]

    T, B = token_seq.shape
    Bp = _round_up(max(B, 8), 8)

    # Pad once per sequence (not per step): ids to (T,Bp), hidden to (Bp,Hp).
    ids_p = jnp.pad(token_seq.astype(jnp.int32), ((0, 0), (0, Bp - B)))
    h0_p = jnp.pad(hidden[0], ((0, Bp - B), (0, Hp - H)))

    grid_spec = pltpu.PrefetchScalarGridSpec(
        num_scalar_prefetch=1,           # token ids -> SMEM
        grid=(T,),
        in_specs=[
            pl.BlockSpec(params["gx_table"].shape, lambda t, ids: (0, 0, 0)),
            pl.BlockSpec((Bp, Hp), lambda t, ids: (0, 0)),
            pl.BlockSpec((Hp, 3 * Hp), lambda t, ids: (0, 0)),
            pl.BlockSpec((1, Hp), lambda t, ids: (0, 0)),
            pl.BlockSpec((Hp, Op), lambda t, ids: (0, 0)),
            pl.BlockSpec((1, Op), lambda t, ids: (0, 0)),
        ],
        out_specs=[
            pl.BlockSpec((None, Bp, Op), lambda t, ids: (t, 0, 0)),
            pl.BlockSpec((Bp, Hp), lambda t, ids: (0, 0)),
        ],
        scratch_shapes=[pltpu.VMEM((Bp, Hp), jnp.float32)],
    )

    flops = T * (2 * Bp * Hp * 3 * Hp + 2 * Bp * Hp * Op + 10 * Bp * Hp)
    transcendentals = T * Bp * 3 * Hp
    bytes_accessed = (ids_p.size * 4 + params["gx_table"].size * 4
                      + h0_p.size * 4 + params["w_h"].size * 2 + Hp * 4
                      + params["w_dec"].size * 2 + Op * 4
                      + T * Bp * Op * 4 + Bp * Hp * 4)

    logits_p, hlast_p = pl.pallas_call(
        gru_seq_kernel,
        grid_spec=grid_spec,
        out_shape=(jax.ShapeDtypeStruct((T, Bp, Op), jnp.float32),
                   jax.ShapeDtypeStruct((Bp, Hp), jnp.float32)),
        compiler_params=pltpu.CompilerParams(
            dimension_semantics=("arbitrary",),      # sequential recurrence
            vmem_limit_bytes=32 * 1024 * 1024),
        cost_estimate=pl.CostEstimate(flops=flops,
                                      transcendentals=transcendentals,
                                      bytes_accessed=bytes_accessed),
    )(ids_p, params["gx_table"], h0_p, params["w_h"], params["b_hn"],
      params["w_dec"], params["b_dec"])

    return logits_p[:, :B, :O], hlast_p[:B, :H][None]


# Module-equivalent forward(input, hidden): one token per batch element.
def rnn_forward(params, token_ids, hidden):
    logits_seq, new_hidden = rnn_forward_seq(params, token_ids[None, :], hidden)
    return logits_seq[0], new_hidden


# Pure-JAX reference (same padded slabs, same bf16 matmul inputs) for checking.
def rnn_seq_reference(params, token_seq, hidden):
    H, O = params["hidden_size"], params["output_size"]
    Hp, Op = params["w_h"].shape[0], params["b_dec"].shape[-1]
    gxtab = params["gx_table"][:, 0, :]
    T, B = token_seq.shape
    h = jnp.pad(hidden[0], ((0, 0), (0, Hp - H)))
    outs = []
    for t in range(T):
        gx = gxtab[token_seq[t]]
        gh = jnp.dot(h.astype(jnp.bfloat16), params["w_h"],
                     preferred_element_type=jnp.float32)
        rz = jax.nn.sigmoid(gx[:, :2 * Hp] + gh[:, :2 * Hp])
        r, z = rz[:, :Hp], rz[:, Hp:]
        n = jnp.tanh(gx[:, 2 * Hp:] + r * (gh[:, 2 * Hp:] + params["b_hn"]))
        h = (1.0 - z) * n + z * h
        logits = (jnp.dot(h.astype(jnp.bfloat16), params["w_dec"],
                          preferred_element_type=jnp.float32) + params["b_dec"])
        outs.append(logits[:, :O])
    return jnp.stack(outs, axis=0), h[:, :H][None]


if __name__ == "__main__":
    input_size = 16      # vocab size
    hidden_size = 32
    output_size = 16
    batch_size = 2
    seq_len = 8

    key = jax.random.PRNGKey(0)
    pkey, ikey = jax.random.split(key)
    params = init_params(pkey, input_size, hidden_size, output_size)

    hidden = jnp.zeros((1, batch_size, hidden_size), jnp.float32)  # init_hidden

    # (a) Module-equivalent single step: forward(input, hidden).
    token_ids = jax.random.randint(ikey, (batch_size,), 0, input_size, jnp.int32)
    logits, new_hidden = rnn_forward(params, token_ids, hidden)
    jax.block_until_ready((logits, new_hidden))
    assert logits.shape == (batch_size, output_size)
    assert logits.dtype == jnp.float32
    assert new_hidden.shape == (1, batch_size, hidden_size)
    assert new_hidden.dtype == jnp.float32

    # (b) Weights-resident in-kernel time loop over a sequence.
    token_seq = jax.random.randint(jax.random.fold_in(ikey, 1),
                                   (seq_len, batch_size), 0, input_size,
                                   jnp.int32)
    logits_seq, hidden_T = rnn_forward_seq(params, token_seq, hidden)
    jax.block_until_ready((logits_seq, hidden_T))
    assert logits_seq.shape == (seq_len, batch_size, output_size)
    assert hidden_T.shape == (1, batch_size, hidden_size)

    ref_logits, ref_hidden = rnn_seq_reference(params, token_seq, hidden)
    max_err = float(jnp.max(jnp.abs(logits_seq - ref_logits)))
    assert jnp.allclose(logits_seq, ref_logits, atol=2e-2, rtol=2e-2), max_err
    assert jnp.allclose(hidden_T, ref_hidden, atol=2e-2, rtol=2e-2)
    assert bool(jnp.all(jnp.isfinite(logits_seq)))

    print("KERNEL_OK")
</pallas_src>

<mosaic_0001>
module attributes {stable_mosaic.version = 11 : i64} {
  func.func @gru_seq_kernel(%arg0: i32, %arg1: memref<1x8xi32, #tpu.memory_space<smem>>, %arg2: memref<16x1x384xf32, #tpu.memory_space<vmem>>, %arg3: memref<8x128xf32, #tpu.memory_space<vmem>>, %arg4: memref<128x384xbf16, #tpu.memory_space<vmem>>, %arg5: memref<1x128xf32, #tpu.memory_space<vmem>>, %arg6: memref<128x128xbf16, #tpu.memory_space<vmem>>, %arg7: memref<1x128xf32, #tpu.memory_space<vmem>>, %arg8: memref<1x8x128xf32, #tpu.memory_space<vmem>>, %arg9: memref<8x128xf32, #tpu.memory_space<vmem>>, %arg10: memref<8x128xf32, #tpu.memory_space<vmem>>) attributes {dimension_semantics = [#tpu.dimension_semantics<arbitrary>], iteration_bounds = array<i64: 1>, scalar_prefetch = 1 : i64, scratch_operands = 1 : i64, tpu.core_type = #tpu.core_type<tc>, window_params = [{pipeline_mode = #tpu.pipeline_mode<synchronous>, transform_indices = @transform_0, window_bounds = array<i64: 16, 1, 384>}, {pipeline_mode = #tpu.pipeline_mode<synchronous>, transform_indices = @transform_1, window_bounds = array<i64: 8, 128>}, {pipeline_mode = #tpu.pipeline_mode<synchronous>, transform_indices = @transform_2, window_bounds = array<i64: 128, 384>}, {pipeline_mode = #tpu.pipeline_mode<synchronous>, transform_indices = @transform_3, window_bounds = array<i64: 1, 128>}, {pipeline_mode = #tpu.pipeline_mode<synchronous>, transform_indices = @transform_4, window_bounds = array<i64: 128, 128>}, {pipeline_mode = #tpu.pipeline_mode<synchronous>, transform_indices = @transform_5, window_bounds = array<i64: 1, 128>}, {transform_indices = @transform_6, window_bounds = array<i64: 1, 8, 128>}, {pipeline_mode = #tpu.pipeline_mode<synchronous>, transform_indices = @transform_7, window_bounds = array<i64: 8, 128>}]} {
    %c0_i32 = arith.constant 0 : i32
    %0 = arith.cmpi eq, %arg0, %c0_i32 : i32
    %1 = arith.extui %0 : i1 to i32
    %c0_i32_0 = arith.constant 0 : i32
    %2 = arith.cmpi ne, %1, %c0_i32_0 : i32
    scf.if %2 {
      %c0_37 = arith.constant 0 : index
      %c0_38 = arith.constant 0 : index
      %82 = vector.load %arg3[%c0_37, %c0_38] : memref<8x128xf32, #tpu.memory_space<vmem>>, vector<8x128xf32>
      %c0_39 = arith.constant 0 : index
      %c0_40 = arith.constant 0 : index
      %83 = vector.load %arg10[%c0_39, %c0_40] : memref<8x128xf32, #tpu.memory_space<vmem>>, vector<8x128xf32>
      tpu.vector_store %arg10[%c0_39, %c0_40], %82 {strides = array<i32>} : memref<8x128xf32, #tpu.memory_space<vmem>>, vector<8x128xf32>,
    } else {
    }
    %3 = arith.index_cast %arg0 : i32 to index
    %c0 = arith.constant 0 : index
    %4 = memref.load %arg1[%3, %c0] : memref<1x8xi32, #tpu.memory_space<smem>>
    %5 = arith.index_cast %4 : i32 to index
    %c0_1 = arith.constant 0 : index
    %c0_2 = arith.constant 0 : index
    %6 = vector.load %arg2[%5, %c0_1, %c0_2] : memref<16x1x384xf32, #tpu.memory_space<vmem>>, vector<1x1x384xf32>
    %7 = vector.shape_cast %6 : vector<1x1x384xf32> to vector<1x384xf32>
    %8 = arith.index_cast %arg0 : i32 to index
    %c1 = arith.constant 1 : index
    %9 = memref.load %arg1[%8, %c1] : memref<1x8xi32, #tpu.memory_space<smem>>
    %10 = arith.index_cast %9 : i32 to index
    %c0_3 = arith.constant 0 : index
    %c0_4 = arith.constant 0 : index
    %11 = vector.load %arg2[%10, %c0_3, %c0_4] : memref<16x1x384xf32, #tpu.memory_space<vmem>>, vector<1x1x384xf32>
    %12 = vector.shape_cast %11 : vector<1x1x384xf32> to vector<1x384xf32>
    %13 = arith.index_cast %arg0 : i32 to index
    %c2 = arith.constant 2 : index
    %14 = memref.load %arg1[%13, %c2] : memref<1x8xi32, #tpu.memory_space<smem>>
    %15 = arith.index_cast %14 : i32 to index
    %c0_5 = arith.constant 0 : index
    %c0_6 = arith.constant 0 : index
    %16 = vector.load %arg2[%15, %c0_5, %c0_6] : memref<16x1x384xf32, #tpu.memory_space<vmem>>, vector<1x1x384xf32>
    %17 = vector.shape_cast %16 : vector<1x1x384xf32> to vector<1x384xf32>
    %18 = arith.index_cast %arg0 : i32 to index
    %c3 = arith.constant 3 : index
    %19 = memref.load %arg1[%18, %c3] : memref<1x8xi32, #tpu.memory_space<smem>>
    %20 = arith.index_cast %19 : i32 to index
    %c0_7 = arith.constant 0 : index
    %c0_8 = arith.constant 0 : index
    %21 = vector.load %arg2[%20, %c0_7, %c0_8] : memref<16x1x384xf32, #tpu.memory_space<vmem>>, vector<1x1x384xf32>
    %22 = vector.shape_cast %21 : vector<1x1x384xf32> to vector<1x384xf32>
    %23 = arith.index_cast %arg0 : i32 to index
    %c4 = arith.constant 4 : index
    %24 = memref.load %arg1[%23, %c4] : memref<1x8xi32, #tpu.memory_space<smem>>
    %25 = arith.index_cast %24 : i32 to index
    %c0_9 = arith.constant 0 : index
    %c0_10 = arith.constant 0 : index
    %26 = vector.load %arg2[%25, %c0_9, %c0_10] : memref<16x1x384xf32, #tpu.memory_space<vmem>>, vector<1x1x384xf32>
    %27 = vector.shape_cast %26 : vector<1x1x384xf32> to vector<1x384xf32>
    %28 = arith.index_cast %arg0 : i32 to index
    %c5 = arith.constant 5 : index
    %29 = memref.load %arg1[%28, %c5] : memref<1x8xi32, #tpu.memory_space<smem>>
    %30 = arith.index_cast %29 : i32 to index
    %c0_11 = arith.constant 0 : index
    %c0_12 = arith.constant 0 : index
    %31 = vector.load %arg2[%30, %c0_11, %c0_12] : memref<16x1x384xf32, #tpu.memory_space<vmem>>, vector<1x1x384xf32>
    %32 = vector.shape_cast %31 : vector<1x1x384xf32> to vector<1x384xf32>
    %33 = arith.index_cast %arg0 : i32 to index
    %c6 = arith.constant 6 : index
    %34 = memref.load %arg1[%33, %c6] : memref<1x8xi32, #tpu.memory_space<smem>>
    %35 = arith.index_cast %34 : i32 to index
    %c0_13 = arith.constant 0 : index
    %c0_14 = arith.constant 0 : index
    %36 = vector.load %arg2[%35, %c0_13, %c0_14] : memref<16x1x384xf32, #tpu.memory_space<vmem>>, vector<1x1x384xf32>
    %37 = vector.shape_cast %36 : vector<1x1x384xf32> to vector<1x384xf32>
    %38 = arith.index_cast %arg0 : i32 to index
    %c7 = arith.constant 7 : index
    %39 = memref.load %arg1[%38, %c7] : memref<1x8xi32, #tpu.memory_space<smem>>
    %40 = arith.index_cast %39 : i32 to index
    %c0_15 = arith.constant 0 : index
    %c0_16 = arith.constant 0 : index
    %41 = vector.load %arg2[%40, %c0_15, %c0_16] : memref<16x1x384xf32, #tpu.memory_space<vmem>>, vector<1x1x384xf32>
    %42 = vector.shape_cast %41 : vector<1x1x384xf32> to vector<1x384xf32>
    %43 = tpu.concatenate %7, %12, %17, %22, %27, %32, %37, %42 in 0 : vector<1x384xf32>, vector<1x384xf32>, vector<1x384xf32>, vector<1x384xf32>, vector<1x384xf32>, vector<1x384xf32>, vector<1x384xf32>, vector<1x384xf32> -> vector<8x384xf32>
    %c0_17 = arith.constant 0 : index
    %c0_18 = arith.constant 0 : index
    %44 = vector.load %arg10[%c0_17, %c0_18] : memref<8x128xf32, #tpu.memory_space<vmem>>, vector<8x128xf32>
    %45 = arith.truncf %44 : vector<8x128xf32> to vector<8x128xbf16>
    %c0_19 = arith.constant 0 : index
    %c0_20 = arith.constant 0 : index
    %46 = vector.load %arg4[%c0_19, %c0_20] : memref<128x384xbf16, #tpu.memory_space<vmem>>, vector<128x384xbf16>
    %cst = arith.constant dense<0.000000e+00> : vector<8x384xf32>
    %47 = tpu.matmul %45, %46, %cst {dimension_numbers = #tpu.dot_dimension_numbers<[1], [0], [0], [1], [0, 0, 1, 1], [], []>} : vector<8x128xbf16>, vector<128x384xbf16>, vector<8x384xf32> -> vector<8x384xf32>
    %48 = vector.extract_strided_slice %43 {offsets = [0, 0], sizes = [8, 256], strides = [1, 1]} : vector<8x384xf32> to vector<8x256xf32>
    %49 = vector.extract_strided_slice %47 {offsets = [0, 0], sizes = [8, 256], strides = [1, 1]} : vector<8x384xf32> to vector<8x256xf32>
    %50 = arith.addf %48, %49 : vector<8x256xf32>
    %51 = arith.negf %50 : vector<8x256xf32>
    %52 = math.exp %51 : vector<8x256xf32>
    %cst_21 = arith.constant 1.000000e+00 : f32
    %53 = vector.broadcast %cst_21 : f32 to vector<8x256xf32>
    %54 = arith.addf %53, %52 : vector<8x256xf32>
    %55 = arith.divf %53, %54 : vector<8x256xf32>
    %56 = vector.extract_strided_slice %55 {offsets = [0, 0], sizes = [8, 128], strides = [1, 1]} : vector<8x256xf32> to vector<8x128xf32>
    %57 = vector.extract_strided_slice %55 {offsets = [0, 128], sizes = [8, 128], strides = [1, 1]} : vector<8x256xf32> to vector<8x128xf32>
    %58 = vector.extract_strided_slice %43 {offsets = [0, 256], sizes = [8, 128], strides = [1, 1]} : vector<8x384xf32> to vector<8x128xf32>
    %59 = vector.extract_strided_slice %47 {offsets = [0, 256], sizes = [8, 128], strides = [1, 1]} : vector<8x384xf32> to vector<8x128xf32>
    %c0_22 = arith.constant 0 : index
    %c0_23 = arith.constant 0 : index
    %60 = vector.load %arg5[%c0_22, %c0_23] : memref<1x128xf32, #tpu.memory_space<vmem>>, vector<1x128xf32>
    %61 = vector.broadcast %60 : vector<1x128xf32> to vector<8x128xf32>
    %62 = arith.addf %59, %61 : vector<8x128xf32>
    %63 = arith.mulf %56, %62 : vector<8x128xf32>
    %64 = arith.addf %58, %63 : vector<8x128xf32>
    %65 = math.tanh %64 : vector<8x128xf32>
    %cst_24 = arith.constant 1.000000e+00 : f32
    %66 = vector.broadcast %cst_24 : f32 to vector<8x128xf32>
    %67 = arith.subf %66, %57 : vector<8x128xf32>
    %68 = arith.mulf %67, %65 : vector<8x128xf32>
    %69 = arith.mulf %57, %44 : vector<8x128xf32>
    %70 = arith.addf %68, %69 : vector<8x128xf32>
    %c0_25 = arith.constant 0 : index
    %c0_26 = arith.constant 0 : index
    %71 = vector.load %arg10[%c0_25, %c0_26] : memref<8x128xf32, #tpu.memory_space<vmem>>, vector<8x128xf32>
    tpu.vector_store %arg10[%c0_25, %c0_26], %70 {strides = array<i32>} : memref<8x128xf32, #tpu.memory_space<vmem>>, vector<8x128xf32>,
    %c0_27 = arith.constant 0 : index
    %c0_28 = arith.constant 0 : index
    %72 = vector.load %arg9[%c0_27, %c0_28] : memref<8x128xf32, #tpu.memory_space<vmem>>, vector<8x128xf32>
    tpu.vector_store %arg9[%c0_27, %c0_28], %70 {strides = array<i32>} : memref<8x128xf32, #tpu.memory_space<vmem>>, vector<8x128xf32>,
    %73 = arith.truncf %70 : vector<8x128xf32> to vector<8x128xbf16>
    %c0_29 = arith.constant 0 : index
    %c0_30 = arith.constant 0 : index
    %74 = vector.load %arg6[%c0_29, %c0_30] : memref<128x128xbf16, #tpu.memory_space<vmem>>, vector<128x128xbf16>
    %cst_31 = arith.constant dense<0.000000e+00> : vector<8x128xf32>
    %75 = tpu.matmul %73, %74, %cst_31 {dimension_numbers = #tpu.dot_dimension_numbers<[1], [0], [0], [1], [0, 0, 1, 1], [], []>} : vector<8x128xbf16>, vector<128x128xbf16>, vector<8x128xf32> -> vector<8x128xf32>
    %c0_32 = arith.constant 0 : index
    %c0_33 = arith.constant 0 : index
    %76 = vector.load %arg7[%c0_32, %c0_33] : memref<1x128xf32, #tpu.memory_space<vmem>>, vector<1x128xf32>
    %77 = vector.broadcast %76 : vector<1x128xf32> to vector<8x128xf32>
    %78 = arith.addf %75, %77 : vector<8x128xf32>
    %c0_34 = arith.constant 0 : index
    %c0_35 = arith.constant 0 : index
    %c0_36 = arith.constant 0 : index
    %79 = vector.load %arg8[%c0_34, %c0_35, %c0_36] : memref<1x8x128xf32, #tpu.memory_space<vmem>>, vector<1x8x128xf32>
    %80 = vector.shape_cast %79 : vector<1x8x128xf32> to vector<8x128xf32>
    %81 = vector.shape_cast %78 : vector<8x128xf32> to vector<1x8x128xf32>
    tpu.vector_store %arg8[%c0_34, %c0_35, %c0_36], %81 {strides = array<i32>} : memref<1x8x128xf32, #tpu.memory_space<vmem>>, vector<1x8x128xf32>,
    return
  }
  func.func @transform_0(%arg0: i32, %arg1: memref<1x8xi32, #tpu.memory_space<smem>>) -> (i32, i32, i32) {
    %c0_i32 = arith.constant 0 : i32
    %c0_i32_0 = arith.constant 0 : i32
    %c0_i32_1 = arith.constant 0 : i32
    %c0_i32_2 = arith.constant 0 : i32
    return %c0_i32, %c0_i32_0, %c0_i32_1 : i32, i32, i32
  }
  func.func @transform_1(%arg0: i32, %arg1: memref<1x8xi32, #tpu.memory_space<smem>>) -> (i32, i32) {
    %c0_i32 = arith.constant 0 : i32
    %c0_i32_0 = arith.constant 0 : i32
    %c0_i32_1 = arith.constant 0 : i32
    return %c0_i32, %c0_i32_0 : i32, i32
  }
  func.func @transform_2(%arg0: i32, %arg1: memref<1x8xi32, #tpu.memory_space<smem>>) -> (i32, i32) {
    %c0_i32 = arith.constant 0 : i32
    %c0_i32_0 = arith.constant 0 : i32
    %c0_i32_1 = arith.constant 0 : i32
    return %c0_i32, %c0_i32_0 : i32, i32
  }
  func.func @transform_3(%arg0: i32, %arg1: memref<1x8xi32, #tpu.memory_space<smem>>) -> (i32, i32) {
    %c0_i32 = arith.constant 0 : i32
    %c0_i32_0 = arith.constant 0 : i32
    %c0_i32_1 = arith.constant 0 : i32
    return %c0_i32, %c0_i32_0 : i32, i32
  }
  func.func @transform_4(%arg0: i32, %arg1: memref<1x8xi32, #tpu.memory_space<smem>>) -> (i32, i32) {
    %c0_i32 = arith.constant 0 : i32
    %c0_i32_0 = arith.constant 0 : i32
    %c0_i32_1 = arith.constant 0 : i32
    return %c0_i32, %c0_i32_0 : i32, i32
  }
  func.func @transform_5(%arg0: i32, %arg1: memref<1x8xi32, #tpu.memory_space<smem>>) -> (i32, i32) {
    %c0_i32 = arith.constant 0 : i32
    %c0_i32_0 = arith.constant 0 : i32
    %c0_i32_1 = arith.constant 0 : i32
    return %c0_i32, %c0_i32_0 : i32, i32
  }
  func.func @transform_6(%arg0: i32, %arg1: memref<1x8xi32, #tpu.memory_space<smem>>) -> (i32, i32, i32) {
    %c0_i32 = arith.constant 0 : i32
    %c0_i32_0 = arith.constant 0 : i32
    %c0_i32_1 = arith.constant 0 : i32
    return %arg0, %c0_i32, %c0_i32_0 : i32, i32, i32
  }
  func.func @transform_7(%arg0: i32, %arg1: memref<1x8xi32, #tpu.memory_space<smem>>) -> (i32, i32) {
    %c0_i32 = arith.constant 0 : i32
    %c0_i32_0 = arith.constant 0 : i32
    %c0_i32_1 = arith.constant 0 : i32
    return %c0_i32, %c0_i32_0 : i32, i32
  }
}

</mosaic_0001>

<llo_original>
// kernel: tpu_custom_call.1
$region0: #{tpu_custom_call.1}
  #allocation0 [shape = 'u32[]', space=smem, size = 0x4, offset = 0x4, fixed_abs, tag = 'smem constant byte address 0x4 - core index']
  #allocation1 [shape = 'u32[144,128]{1,0:T(1,128)}', space=vmem, size = 0x12000, scoped, tag = 'internal scratch']
  #allocation2 [shape = 'f32[8,128]{1,0:T(8,128)}', space=vmem, size = 0x1000, scoped, tag = 'scratch operand']
  #allocation3 [shape = 's32[1]{0}', space=sflag, size = 0x4, scoped, tag = 'scoped memory for tpu_custom_call.1']
  #allocation4 [shape = 'u8[512]{0}', space=smem, size = 0x200, scoped, tag = 'prefetched SMEM operand 0']
  %s0 = inlined_call_operand.hbm [shape: s32[1,8], index: 0, kind: input, shape index: {}]
  %s1 = inlined_call_operand.hbm [shape: f32[16,1,384], index: 1, kind: input, shape index: {}]
  %s2 = inlined_call_operand.hbm [shape: f32[8,128], index: 2, kind: input, shape index: {}]
  %s3 = inlined_call_operand.hbm [shape: bf16[128,384], index: 3, kind: input, shape index: {}]
  %s4 = inlined_call_operand.vmem [shape: f32[1,128], index: 4, kind: input, shape index: {}]
  %s5 = inlined_call_operand.hbm [shape: bf16[128,128], index: 5, kind: input, shape index: {}]
  %s6 = inlined_call_operand.vmem [shape: f32[1,128], index: 6, kind: input, shape index: {}]
  %s7 = inlined_call_operand.hbm [shape: f32[1,8,128], index: 7, kind: output, shape index: {0}]
  %s8 = inlined_call_operand.hbm [shape: f32[8,128], index: 8, kind: output, shape index: {1}]
  %9 = xla_tuple %s7, %s8
  %s10 = sld [smem:[#allocation0]]
  $region62: #{tpu_custom_call.1} parent=0
    _
  %s12 = ssub.s32 1, %s10
  %s13 = scalar_select 0, %s12, %s10
  %15 = dma.hbm_to_smem %s0, 16, [#allocation4], [#allocation3]
  %16 = dma.done [#allocation3], 16
  %17 = sfence
  $region1: #{tpu_custom_call.1} parent=0
    #allocation5 [shape = 'u8[24576]{0}', space=vmem, size = 0x6000, scoped, tag = 'input window, operand 1, single buffered']
    #allocation6 [shape = 's32[1]{0}', space=sflag, size = 0x4, scoped, tag = 'scoped memory for tpu_custom_call.1']
    #allocation7 [shape = 's32[1]{0}', space=sflag, size = 0x4, scoped, tag = 'scoped memory for tpu_custom_call.1']
    #allocation8 [shape = 'u8[4096]{0}', space=vmem, size = 0x1000, scoped, tag = 'input window, operand 2, single buffered']
    #allocation9 [shape = 's32[1]{0}', space=sflag, size = 0x4, scoped, tag = 'scoped memory for tpu_custom_call.1']
    #allocation10 [shape = 'u8[98304]{0}', space=vmem, size = 0x18000, scoped, tag = 'input window, operand 3, single buffered']
    #allocation11 [shape = 'u8[32768]{0}', space=vmem, size = 0x8000, scoped, tag = 'input window, operand 5, single buffered']
    #allocation12 [shape = 's32[1]{0}', space=sflag, size = 0x4, scoped, tag = 'scoped memory for tpu_custom_call.1']
    #allocation13 [shape = 'u8[4096]{0}', space=vmem, size = 0x1000, scoped, tag = 'output window, operand 0, single buffered']
    #allocation14 [shape = 'u8[4096]{0}', space=vmem, size = 0x1000, scoped, tag = 'output window, operand 1, single buffered']
    #allocation15 [shape = 's32[1]{0}', space=sflag, size = 0x4, scoped, tag = 'scoped memory for tpu_custom_call.1']
    %18 = vsyncpa [#allocation6], 0
    %19 = vsyncpa [#allocation9], 0
    %20 = vsyncpa [#allocation12], 0
    %21 = vsyncpa [#allocation7], 0
    %22 = vsyncpa [#allocation15], 0
    // Predicated region
    $region2: #{tpu_custom_call.1} parent=1 // pred_check
      _
    $region3: #{tpu_custom_call.1} parent=1 // pred_check_branch
      %24 = sbr.rel (0) target = $region5
    $region4: #{tpu_custom_call.1} parent=1 // pred_region
      %s26 = ssub.s32 768, 768
      %27 = vsyncadd [#allocation6], %s26
      %s28 = sshll.u32 [#allocation5], 4
      %s29 = int_to_ptr.vmem [resolvable:$true] %s28
      %34 = dma.hbm_to_vmem [thread:$0]  %s1, 768, %s29, [#allocation6], 48, 48, 3
    $region5: #{tpu_custom_call.1} parent=1 // pred_fallthru
      _
    // Predicated region
    $region6: #{tpu_custom_call.1} parent=1 // pred_check
      _
    $region7: #{tpu_custom_call.1} parent=1 // pred_check_branch
      %36 = sbr.rel (0) target = $region9
    $region8: #{tpu_custom_call.1} parent=1 // pred_region
      %s38 = ssub.s32 128, 128
      %39 = vsyncadd [#allocation9], %s38
      %s41 = sshll.u32 [#allocation8], 4
      %s42 = int_to_ptr.vmem [resolvable:$true] %s41
      %44 = dma.hbm_to_vmem [thread:$0]  %s2, 128, %s42, [#allocation9]
    $region9: #{tpu_custom_call.1} parent=1 // pred_fallthru
      _
    // Predicated region
    $region10: #{tpu_custom_call.1} parent=1 // pred_check
      _
    $region11: #{tpu_custom_call.1} parent=1 // pred_check_branch
      %46 = sbr.rel (0) target = $region13
    $region12: #{tpu_custom_call.1} parent=1 // pred_region
      %s48 = ssub.s32 3072, 3072
      %49 = vsyncadd [#allocation9], %s48
      %s50 = sshll.u32 [#allocation10], 4
      %s51 = int_to_ptr.vmem [resolvable:$true] %s50
      %56 = dma.hbm_to_vmem [thread:$0]  %s3, 3072, %s51, [#allocation9], 192, 192, 12
    $region13: #{tpu_custom_call.1} parent=1 // pred_fallthru
      _
    // Predicated region
    $region14: #{tpu_custom_call.1} parent=1 // pred_check
      _
    $region15: #{tpu_custom_call.1} parent=1 // pred_check_branch
      %58 = sbr.rel (0) target = $region17
    $region16: #{tpu_custom_call.1} parent=1 // pred_region
      _
    $region17: #{tpu_custom_call.1} parent=1 // pred_fallthru
      _
    // Predicated region
    $region18: #{tpu_custom_call.1} parent=1 // pred_check
      _
    $region19: #{tpu_custom_call.1} parent=1 // pred_check_branch
      %60 = sbr.rel (0) target = $region21
    $region20: #{tpu_custom_call.1} parent=1 // pred_region
      %s62 = ssub.s32 1024, 1024
      %63 = vsyncadd [#allocation12], %s62
      %s64 = sshll.u32 [#allocation11], 4
      %s65 = int_to_ptr.vmem [resolvable:$true] %s64
      %70 = dma.hbm_to_vmem [thread:$0]  %s5, 1024, %s65, [#allocation12], 64, 64, 4
    $region21: #{tpu_custom_call.1} parent=1 // pred_fallthru
      _
    // Predicated region
    $region22: #{tpu_custom_call.1} parent=1 // pred_check
      _
    $region23: #{tpu_custom_call.1} parent=1 // pred_check_branch
      %72 = sbr.rel (0) target = $region25
    $region24: #{tpu_custom_call.1} parent=1 // pred_region
      _
    $region25: #{tpu_custom_call.1} parent=1 // pred_fallthru
      _
    // Predicated region
    $region26: #{tpu_custom_call.1} parent=1 // pred_check
      _
    $region27: #{tpu_custom_call.1} parent=1 // pred_check_branch
      %74 = sbr.rel (0) target = $region29
    $region28: #{tpu_custom_call.1} parent=1 // pred_region
      %75 = dma.done [#allocation6], 768
    $region29: #{tpu_custom_call.1} parent=1 // pred_fallthru
      _
    // Predicated region
    $region30: #{tpu_custom_call.1} parent=1 // pred_check
      _
    $region31: #{tpu_custom_call.1} parent=1 // pred_check_branch
      %77 = sbr.rel (0) target = $region33
    $region32: #{tpu_custom_call.1} parent=1 // pred_region
      %78 = dma.done [#allocation9], 128
    $region33: #{tpu_custom_call.1} parent=1 // pred_fallthru
      _
    // Predicated region
    $region34: #{tpu_custom_call.1} parent=1 // pred_check
      _
    $region35: #{tpu_custom_call.1} parent=1 // pred_check_branch
      %80 = sbr.rel (0) target = $region37
    $region36: #{tpu_custom_call.1} parent=1 // pred_region
      %81 = dma.done [#allocation9], 3072
    $region37: #{tpu_custom_call.1} parent=1 // pred_fallthru
      _
    // Predicated region
    $region38: #{tpu_custom_call.1} parent=1 // pred_check
      _
    $region39: #{tpu_custom_call.1} parent=1 // pred_check_branch
      %83 = sbr.rel (0) target = $region41
    $region40: #{tpu_custom_call.1} parent=1 // pred_region
      %84 = dma.done [#allocation12], 1024
    $region41: #{tpu_custom_call.1} parent=1 // pred_fallthru
      _
    %p86 = scmp.eq.s32.totalorder 0, 0
    // Predicated region
    $region42: #{tpu_custom_call.1} parent=1 // pred_check
      %p87 = pneg %p86
    $region43: #{tpu_custom_call.1} parent=1 // pred_check_branch
      %89 = sbr.rel (%p87) target = $region45
    $region44: #{tpu_custom_call.1} parent=1 // pred_region
      %v90 = vld [vmem:[#allocation8] sm:$0xff]
      %91 = vst [vmem:[#allocation2] sm:$0xff] %v90
    $region45: #{tpu_custom_call.1} parent=1 // pred_fallthru
      _
    %s92 = smul.u32 0, 128
    %s93 = sld [smem:[#allocation4 + %s92]]
    %s94 = smul.u32 %s93, 3
    %s95 = scalar_lea.vmem [#allocation5], %s94
    %v96 = vld [vmem:[%s95] sm:$0x7]
    %s97 = sadd.s32 %s92, 1
    %s98 = sld [smem:[#allocation4 + %s97]]
    %s99 = smul.u32 %s98, 3
    %s100 = scalar_lea.vmem [#allocation5], %s99
    %v101 = vld [vmem:[%s100] sm:$0x7]
    %s102 = sadd.s32 %s92, 2
    %s103 = sld [smem:[#allocation4 + %s102]]
    %s104 = smul.u32 %s103, 3
    %s105 = scalar_lea.vmem [#allocation5], %s104
    %v106 = vld [vmem:[%s105] sm:$0x7]
    %s107 = sadd.s32 %s92, 3
    %s108 = sld [smem:[#allocation4 + %s107]]
    %s109 = smul.u32 %s108, 3
    %s110 = scalar_lea.vmem [#allocation5], %s109
    %v111 = vld [vmem:[%s110] sm:$0x7]
    %s112 = sadd.s32 %s92, 4
    %s113 = sld [smem:[#allocation4 + %s112]]
    %s114 = smul.u32 %s113, 3
    %s115 = scalar_lea.vmem [#allocation5], %s114
    %v116 = vld [vmem:[%s115] sm:$0x7]
    %s117 = sadd.s32 %s92, 5
    %s118 = sld [smem:[#allocation4 + %s117]]
    %s119 = smul.u32 %s118, 3
    %s120 = scalar_lea.vmem [#allocation5], %s119
    %v121 = vld [vmem:[%s120] sm:$0x7]
    %s122 = sadd.s32 %s92, 6
    %s123 = sld [smem:[#allocation4 + %s122]]
    %s124 = smul.u32 %s123, 3
    %s125 = scalar_lea.vmem [#allocation5], %s124
    %v126 = vld [vmem:[%s125] sm:$0x7]
    %s127 = sadd.s32 %s92, 7
    %s128 = sld [smem:[#allocation4 + %s127]]
    %s129 = smul.u32 %s128, 3
    %s130 = scalar_lea.vmem [#allocation5], %s129
    %v131 = vld [vmem:[%s130] sm:$0x7]
    %v133 = vlaneseq
    %v134 = vshrl.u32 %v133, 7
    %v135 = vsub.s32 0, %v134
    %v136 = vrot.slane %v96, %v135
    %v137 = vlaneseq
    %v138 = vshrl.u32 %v137, 7
    %v139 = vsub.s32 1, %v138
    %v140 = vrot.slane %v96, %v139
    %v141 = vlaneseq
    %v142 = vshrl.u32 %v141, 7
    %v143 = vsub.s32 2, %v142
    %v144 = vrot.slane %v96, %v143
    %v149 = vlaneseq
    %v150 = vshrl.u32 %v149, 7
    %v151 = vsub.s32 0, %v150
    %v152 = vrot.slane %v101, %v151
    %v153 = vlaneseq
    %v154 = vshrl.u32 %v153, 7
    %v155 = vsub.s32 1, %v154
    %v156 = vrot.slane %v101, %v155
    %v157 = vlaneseq
    %v158 = vshrl.u32 %v157, 7
    %v159 = vsub.s32 2, %v158
    %v160 = vrot.slane %v101, %v159
    %v165 = vlaneseq
    %v166 = vshrl.u32 %v165, 7
    %v167 = vsub.s32 0, %v166
    %v168 = vrot.slane %v106, %v167
    %v169 = vlaneseq
    %v170 = vshrl.u32 %v169, 7
    %v171 = vsub.s32 1, %v170
    %v172 = vrot.slane %v106, %v171
    %v173 = vlaneseq
    %v174 = vshrl.u32 %v173, 7
    %v175 = vsub.s32 2, %v174
    %v176 = vrot.slane %v106, %v175
    %v181 = vlaneseq
    %v182 = vshrl.u32 %v181, 7
    %v183 = vsub.s32 0, %v182
    %v184 = vrot.slane %v111, %v183
    %v185 = vlaneseq
    %v186 = vshrl.u32 %v185, 7
    %v187 = vsub.s32 1, %v186
    %v188 = vrot.slane %v111, %v187
    %v189 = vlaneseq
    %v190 = vshrl.u32 %v189, 7
    %v191 = vsub.s32 2, %v190
    %v192 = vrot.slane %v111, %v191
    %v197 = vlaneseq
    %v198 = vshrl.u32 %v197, 7
    %v199 = vsub.s32 0, %v198
    %v200 = vrot.slane %v116, %v199
    %v201 = vlaneseq
    %v202 = vshrl.u32 %v201, 7
    %v203 = vsub.s32 1, %v202
    %v204 = vrot.slane %v116, %v203
    %v205 = vlaneseq
    %v206 = vshrl.u32 %v205, 7
    %v207 = vsub.s32 2, %v206
    %v208 = vrot.slane %v116, %v207
    %v213 = vlaneseq
    %v214 = vshrl.u32 %v213, 7
    %v215 = vsub.s32 0, %v214
    %v216 = vrot.slane %v121, %v215
    %v217 = vlaneseq
    %v218 = vshrl.u32 %v217, 7
    %v219 = vsub.s32 1, %v218
    %v220 = vrot.slane %v121, %v219
    %v221 = vlaneseq
    %v222 = vshrl.u32 %v221, 7
    %v223 = vsub.s32 2, %v222
    %v224 = vrot.slane %v121, %v223
    %v229 = vlaneseq
    %v230 = vshrl.u32 %v229, 7
    %v231 = vsub.s32 0, %v230
    %v232 = vrot.slane %v126, %v231
    %v233 = vlaneseq
    %v234 = vshrl.u32 %v233, 7
    %v235 = vsub.s32 1, %v234
    %v236 = vrot.slane %v126, %v235
    %v237 = vlaneseq
    %v238 = vshrl.u32 %v237, 7
    %v239 = vsub.s32 2, %v238
    %v240 = vrot.slane %v126, %v239
    %v245 = vlaneseq
    %v246 = vshrl.u32 %v245, 7
    %v247 = vsub.s32 0, %v246
    %v248 = vrot.slane %v131, %v247
    %v249 = vlaneseq
    %v250 = vshrl.u32 %v249, 7
    %v251 = vsub.s32 1, %v250
    %v252 = vrot.slane %v131, %v251
    %v253 = vlaneseq
    %v254 = vshrl.u32 %v253, 7
    %v255 = vsub.s32 2, %v254
    %v256 = vrot.slane %v131, %v255
    %vm260 = vcmask 1040384
    %v261 = vsel %vm260, %v136, %v152
    %v262 = vsel %vm260, %v140, %v156
    %v263 = vsel %vm260, %v144, %v160
    %vm264 = vcmask 1041408
    %v265 = vsel %vm264, %v261, %v168
    %v266 = vsel %vm264, %v262, %v172
    %v267 = vsel %vm264, %v263, %v176
    %vm268 = vcmask 1042432
    %v269 = vsel %vm268, %v265, %v184
    %v270 = vsel %vm268, %v266, %v188
    %v271 = vsel %vm268, %v267, %v192
    %vm272 = vcmask 1043456
    %v273 = vsel %vm272, %v269, %v200
    %v274 = vsel %vm272, %v270, %v204
    %v275 = vsel %vm272, %v271, %v208
    %vm276 = vcmask 1044480
    %v277 = vsel %vm276, %v273, %v216
    %v278 = vsel %vm276, %v274, %v220
    %v279 = vsel %vm276, %v275, %v224
    %vm280 = vcmask 1045504
    %v281 = vsel %vm280, %v277, %v232
    %v282 = vsel %vm280, %v278, %v236
    %v283 = vsel %vm280, %v279, %v240
    %vm284 = vcmask 1046528
    %v285 = vsel %vm284, %v281, %v248
    %v286 = vsel %vm284, %v282, %v252
    %v287 = vsel %vm284, %v283, %v256
    %v288 = vld [vmem:[#allocation2] sm:$0xff]
    %v289 = vpack.c.bf16 %v288, %v288
    %v290 = vld [vmem:[#allocation10] sm:$0xff]
    %v291 = vld [vmem:[#allocation10 + $0x8] sm:$0xf]
    %v292 = vld [vmem:[#allocation10 + $0xc] sm:$0xff]
    %v293 = vld [vmem:[#allocation10 + $0x14] sm:$0xf]
    %v294 = vld [vmem:[#allocation10 + $0x18] sm:$0xff]
    %v295 = vld [vmem:[#allocation10 + $0x20] sm:$0xf]
    %v296 = vld [vmem:[#allocation10 + $0x24] sm:$0xff]
    %v297 = vld [vmem:[#allocation10 + $0x2c] sm:$0xf]
    %v298 = vld [vmem:[#allocation10 + $0x30] sm:$0xff]
    %v299 = vld [vmem:[#allocation10 + $0x38] sm:$0xf]
    %v300 = vld [vmem:[#allocation10 + $0x3c] sm:$0xff]
    %v301 = vld [vmem:[#allocation10 + $0x44] sm:$0xf]
    %v302 = vld [vmem:[#allocation10 + $0x48] sm:$0xff]
    %v303 = vld [vmem:[#allocation10 + $0x50] sm:$0xf]
    %v304 = vld [vmem:[#allocation10 + $0x54] sm:$0xff]
    %v305 = vld [vmem:[#allocation10 + $0x5c] sm:$0xf]
    %v306 = vld [vmem:[#allocation10 + $0x60] sm:$0xff]
    %v307 = vld [vmem:[#allocation10 + $0x68] sm:$0xf]
    %v308 = vld [vmem:[#allocation10 + $0x6c] sm:$0xff]
    %v309 = vld [vmem:[#allocation10 + $0x74] sm:$0xf]
    %v310 = vld [vmem:[#allocation10 + $0x78] sm:$0xff]
    %v311 = vld [vmem:[#allocation10 + $0x80] sm:$0xf]
    %v312 = vld [vmem:[#allocation10 + $0x84] sm:$0xff]
    %v313 = vld [vmem:[#allocation10 + $0x8c] sm:$0xf]
    %v314 = vld [vmem:[#allocation10 + $0x90] sm:$0xff]
    %v315 = vld [vmem:[#allocation10 + $0x98] sm:$0xf]
    %v316 = vld [vmem:[#allocation10 + $0x9c] sm:$0xff]
    %v317 = vld [vmem:[#allocation10 + $0xa4] sm:$0xf]
    %v318 = vld [vmem:[#allocation10 + $0xa8] sm:$0xff]
    %v319 = vld [vmem:[#allocation10 + $0xb0] sm:$0xf]
    %v320 = vld [vmem:[#allocation10 + $0xb4] sm:$0xff]
    %v321 = vld [vmem:[#allocation10 + $0xbc] sm:$0xf]
    %v354 = vunpack.c.l.b16 %v290
    %v355 = vunpack.c.h.b16 %v290
    %v356 = vunpack.c.l.b16 %v291
    %v357 = vunpack.c.l.b16 %v292
    %v358 = vunpack.c.h.b16 %v292
    %v359 = vunpack.c.l.b16 %v293
    %v360 = vunpack.c.l.b16 %v294
    %v361 = vunpack.c.h.b16 %v294
    %v362 = vunpack.c.l.b16 %v295
    %v363 = vunpack.c.l.b16 %v296
    %v364 = vunpack.c.h.b16 %v296
    %v365 = vunpack.c.l.b16 %v297
    %v366 = vunpack.c.l.b16 %v298
    %v367 = vunpack.c.h.b16 %v298
    %v368 = vunpack.c.l.b16 %v299
    %v369 = vunpack.c.l.b16 %v300
    %v370 = vunpack.c.h.b16 %v300
    %v371 = vunpack.c.l.b16 %v301
    %v372 = vunpack.c.l.b16 %v302
    %v373 = vunpack.c.h.b16 %v302
    %v374 = vunpack.c.l.b16 %v303
    %v375 = vunpack.c.l.b16 %v304
    %v376 = vunpack.c.h.b16 %v304
    %v377 = vunpack.c.l.b16 %v305
    %v378 = vunpack.c.l.b16 %v306
    %v379 = vunpack.c.h.b16 %v306
    %v380 = vunpack.c.l.b16 %v307
    %v381 = vunpack.c.l.b16 %v308
    %v382 = vunpack.c.h.b16 %v308
    %v383 = vunpack.c.l.b16 %v309
    %v384 = vunpack.c.l.b16 %v310
    %v385 = vunpack.c.h.b16 %v310
    %v386 = vunpack.c.l.b16 %v311
    %v387 = vunpack.c.l.b16 %v312
    %v388 = vunpack.c.h.b16 %v312
    %v389 = vunpack.c.l.b16 %v313
    %v390 = vunpack.c.l.b16 %v314
    %v391 = vunpack.c.h.b16 %v314
    %v392 = vunpack.c.l.b16 %v315
    %v393 = vunpack.c.l.b16 %v316
    %v394 = vunpack.c.h.b16 %v316
    %v395 = vunpack.c.l.b16 %v317
    %v396 = vunpack.c.l.b16 %v318
    %v397 = vunpack.c.h.b16 %v318
    %v398 = vunpack.c.l.b16 %v319
    %v399 = vunpack.c.l.b16 %v320
    %v400 = vunpack.c.h.b16 %v320
    %v401 = vunpack.c.l.b16 %v321
    %v402 = vpack.c.b16 %v357, %v354
    %v403 = vpack.c.b16 %v358, %v355
    %v404 = vpack.c.b16 %v359, %v356
    %v405 = vpack.c.b16 %v363, %v360
    %v406 = vpack.c.b16 %v364, %v361
    %v407 = vpack.c.b16 %v365, %v362
    %v408 = vpack.c.b16 %v369, %v366
    %v409 = vpack.c.b16 %v370, %v367
    %v410 = vpack.c.b16 %v371, %v368
    %v411 = vpack.c.b16 %v375, %v372
    %v412 = vpack.c.b16 %v376, %v373
    %v413 = vpack.c.b16 %v377, %v374
    %v414 = vpack.c.b16 %v381, %v378
    %v415 = vpack.c.b16 %v382, %v379
    %v416 = vpack.c.b16 %v383, %v380
    %v417 = vpack.c.b16 %v387, %v384
    %v418 = vpack.c.b16 %v388, %v385
    %v419 = vpack.c.b16 %v389, %v386
    %v420 = vpack.c.b16 %v393, %v390
    %v421 = vpack.c.b16 %v394, %v391
    %v422 = vpack.c.b16 %v395, %v392
    %v423 = vpack.c.b16 %v399, %v396
    %v424 = vpack.c.b16 %v400, %v397
    %v425 = vpack.c.b16 %v401, %v398
    %450 = vmatprep.subr.bf16.mxu0 %v424
    %451 = vmatpush1.bf16.msra.mxu0 %v423
    %452 = vmatprep.subr.bf16.mxu0 %v421
    %453 = vmatpush1.bf16.msra.mxu0 %v420
    %454 = vmatprep.subr.bf16.mxu0 %v418
    %455 = vmatpush1.bf16.msra.mxu0 %v417
    %456 = vmatprep.subr.bf16.mxu0 %v415
    %457 = vmatpush1.bf16.msra.mxu0 %v414
    %458 = vmatprep.subr.bf16.mxu0 %v412
    %459 = vmatpush1.bf16.msra.mxu0 %v411
    %460 = vmatprep.subr.bf16.mxu0 %v409
    %461 = vmatpush1.bf16.msra.mxu0 %v408
    %462 = vmatprep.subr.bf16.mxu0 %v406
    %463 = vmatpush1.bf16.msra.mxu0 %v405
    %464 = vmatprep.subr.bf16.mxu0 %v403
    %465 = vmatpush1.bf16.msra.mxu0 %v402
    %466 = vmatprep.subr.bf16.mxu0 0
    %467 = vmatpush2.bf16.msra.mxu0 0
    %468 = vmatprep.subr.bf16.mxu0 0
    %469 = vmatpush2.bf16.msra.mxu0 0
    %470 = vmatprep.subr.bf16.mxu0 0
    %471 = vmatpush2.bf16.msra.mxu0 0
    %472 = vmatprep.subr.bf16.mxu0 0
    %473 = vmatpush2.bf16.msra.mxu0 0
    %474 = vmatprep.subr.bf16.mxu0 0
    %475 = vmatpush2.bf16.msra.mxu0 0
    %476 = vmatprep.subr.bf16.mxu0 0
    %477 = vmatpush2.bf16.msra.mxu0 0
    %478 = vmatprep.subr.bf16.mxu0 0
    %479 = vmatpush2.bf16.msra.mxu0 0
    %480 = vmatprep.subr.bf16.mxu0 0
    %481 = vmatpush2.bf16.msra.mxu0 0
    %482 = vmatprep.mubr.bf16.mxu0 0
    %483 = vmatmul.mubr.bf16.gmra.mxu0 %v289
    %v484 = vpop.f32.mrf.mxu0
    %v485 = vadd.f32 0.0, %v484
    %v486 = vpop.f32.mrf.mxu0
    %v487 = vadd.f32 0.0, %v486
    %v488 = vpop.f32.mrf.mxu0
    %v489 = vpop.f32.mrf.mxu0
    %490 = vdwg.mxu0
    %491 = vmatprep.subr.bf16.mxu0 0
    %492 = vmatpush1.bf16.msra.mxu0 %v425
    %493 = vmatprep.subr.bf16.mxu0 0
    %494 = vmatpush1.bf16.msra.mxu0 %v422
    %495 = vmatprep.subr.bf16.mxu0 0
    %496 = vmatpush1.bf16.msra.mxu0 %v419
    %497 = vmatprep.subr.bf16.mxu0 0
    %498 = vmatpush1.bf16.msra.mxu0 %v416
    %499 = vmatprep.subr.bf16.mxu0 0
    %500 = vmatpush1.bf16.msra.mxu0 %v413
    %501 = vmatprep.subr.bf16.mxu0 0
    %502 = vmatpush1.bf16.msra.mxu0 %v410
    %503 = vmatprep.subr.bf16.mxu0 0
    %504 = vmatpush1.bf16.msra.mxu0 %v407
    %505 = vmatprep.subr.bf16.mxu0 0
    %506 = vmatpush1.bf16.msra.mxu0 %v404
    %507 = vmatprep.subr.bf16.mxu0 0
    %508 = vmatpush2.bf16.msra.mxu0 0
    %509 = vmatprep.subr.bf16.mxu0 0
    %510 = vmatpush2.bf16.msra.mxu0 0
    %511 = vmatprep.subr.bf16.mxu0 0
    %512 = vmatpush2.bf16.msra.mxu0 0
    %513 = vmatprep.subr.bf16.mxu0 0
    %514 = vmatpush2.bf16.msra.mxu0 0
    %515 = vmatprep.subr.bf16.mxu0 0
    %516 = vmatpush2.bf16.msra.mxu0 0
    %517 = vmatprep.subr.bf16.mxu0 0
    %518 = vmatpush2.bf16.msra.mxu0 0
    %519 = vmatprep.subr.bf16.mxu0 0
    %520 = vmatpush2.bf16.msra.mxu0 0
    %521 = vmatprep.subr.bf16.mxu0 0
    %522 = vmatpush2.bf16.msra.mxu0 0
    %523 = vmatprep.mubr.bf16.mxu0 0
    %524 = vmatmul.mubr.bf16.gmra.mxu0 %v289
    %v525 = vpop.f32.mrf.mxu0
    %v526 = vadd.f32 0.0, %v525
    %v527 = vpop.f32.mrf.mxu0
    %v528 = vpop.f32.mrf.mxu0
    %v529 = vpop.f32.mrf.mxu0
    %530 = vdwg.mxu0
    %v531 = vadd.f32 %v285, %v485
    %v532 = vadd.f32 %v286, %v487
    %v533 = vxor.u32 %v531, 2147483648
    %v534 = vxor.u32 %v532, 2147483648
    %v535 = vmul.f32 %v533, 1.442695
    %v536 = vpow.pop %v535
    %v537 = vmul.f32 %v534, 1.442695
    %v538 = vpow.pop %v537
    %v539 = vadd.f32 %v536, 1.0
    %v540 = vadd.f32 %v538, 1.0
    %v541 = vrcp.pop %v539
    %v542 = vmul.f32 1.0, %v541
    %v543 = vrcp.pop %v540
    %v544 = vmul.f32 1.0, %v543
    %v545 = vld [vmem:[%s4] sm:$0x1]
    %v547 = vlaneseq
    %v548 = vshrl.u32 %v547, 7
    %v549 = vsub.s32 0, %v548
    %v550 = vrot.slane %v545, %v549
    %v552 = vadd.f32 %v526, %v550
    %v553 = vmul.f32 %v542, %v552
    %v554 = vadd.f32 %v287, %v553
    %v555 = vtanh.pop %v554
    %v556 = vsub.f32 1.0, %v544
    %v557 = vmul.f32 %v556, %v555
    %v558 = vmul.f32 %v544, %v288
    %v559 = vadd.f32 %v557, %v558
    %560 = vst [vmem:[#allocation2] sm:$0xff] %v559
    %561 = vst [vmem:[#allocation14] sm:$0xff] %v559
    %v562 = vpack.c.bf16 %v559, %v559
    %v563 = vld [vmem:[#allocation11] sm:$0xf]
    %v564 = vld [vmem:[#allocation11 + $0x4] sm:$0xf]
    %v565 = vld [vmem:[#allocation11 + $0x8] sm:$0xf]
    %v566 = vld [vmem:[#allocation11 + $0xc] sm:$0xf]
    %v567 = vld [vmem:[#allocation11 + $0x10] sm:$0xf]
    %v568 = vld [vmem:[#allocation11 + $0x14] sm:$0xf]
    %v569 = vld [vmem:[#allocation11 + $0x18] sm:$0xf]
    %v570 = vld [vmem:[#allocation11 + $0x1c] sm:$0xf]
    %v571 = vld [vmem:[#allocation11 + $0x20] sm:$0xf]
    %v572 = vld [vmem:[#allocation11 + $0x24] sm:$0xf]
    %v573 = vld [vmem:[#allocation11 + $0x28] sm:$0xf]
    %v574 = vld [vmem:[#allocation11 + $0x2c] sm:$0xf]
    %v575 = vld [vmem:[#allocation11 + $0x30] sm:$0xf]
    %v576 = vld [vmem:[#allocation11 + $0x34] sm:$0xf]
    %v577 = vld [vmem:[#allocation11 + $0x38] sm:$0xf]
    %v578 = vld [vmem:[#allocation11 + $0x3c] sm:$0xf]
    %v579 = vld [vmem:[%s6] sm:$0x1]
    %v581 = vlaneseq
    %v582 = vshrl.u32 %v581, 7
    %v583 = vsub.s32 0, %v582
    %v584 = vrot.slane %v579, %v583
    %v602 = vunpack.c.l.b16 %v563
    %v603 = vunpack.c.l.b16 %v564
    %v604 = vunpack.c.l.b16 %v565
    %v605 = vunpack.c.l.b16 %v566
    %v606 = vunpack.c.l.b16 %v567
    %v607 = vunpack.c.l.b16 %v568
    %v608 = vunpack.c.l.b16 %v569
    %v609 = vunpack.c.l.b16 %v570
    %v610 = vunpack.c.l.b16 %v571
    %v611 = vunpack.c.l.b16 %v572
    %v612 = vunpack.c.l.b16 %v573
    %v613 = vunpack.c.l.b16 %v574
    %v614 = vunpack.c.l.b16 %v575
    %v615 = vunpack.c.l.b16 %v576
    %v616 = vunpack.c.l.b16 %v577
    %v617 = vunpack.c.l.b16 %v578
    %v618 = vpack.c.b16 %v603, %v602
    %v619 = vpack.c.b16 %v605, %v604
    %v620 = vpack.c.b16 %v607, %v606
    %v621 = vpack.c.b16 %v609, %v608
    %v622 = vpack.c.b16 %v611, %v610
    %v623 = vpack.c.b16 %v613, %v612
    %v624 = vpack.c.b16 %v615, %v614
    %v625 = vpack.c.b16 %v617, %v616
    %634 = vmatprep.subr.bf16.mxu0 0
    %635 = vmatpush1.bf16.msra.mxu0 %v625
    %636 = vmatprep.subr.bf16.mxu0 0
    %637 = vmatpush1.bf16.msra.mxu0 %v624
    %638 = vmatprep.subr.bf16.mxu0 0
    %639 = vmatpush1.bf16.msra.mxu0 %v623
    %640 = vmatprep.subr.bf16.mxu0 0
    %641 = vmatpush1.bf16.msra.mxu0 %v622
    %642 = vmatprep.subr.bf16.mxu0 0
    %643 = vmatpush1.bf16.msra.mxu0 %v621
    %644 = vmatprep.subr.bf16.mxu0 0
    %645 = vmatpush1.bf16.msra.mxu0 %v620
    %646 = vmatprep.subr.bf16.mxu0 0
    %647 = vmatpush1.bf16.msra.mxu0 %v619
    %648 = vmatprep.subr.bf16.mxu0 0
    %649 = vmatpush1.bf16.msra.mxu0 %v618
    %650 = vmatprep.subr.bf16.mxu0 0
    %651 = vmatpush2.bf16.msra.mxu0 0
    %652 = vmatprep.subr.bf16.mxu0 0
    %653 = vmatpush2.bf16.msra.mxu0 0
    %654 = vmatprep.subr.bf16.mxu0 0
    %655 = vmatpush2.bf16.msra.mxu0 0
    %656 = vmatprep.subr.bf16.mxu0 0
    %657 = vmatpush2.bf16.msra.mxu0 0
    %658 = vmatprep.subr.bf16.mxu0 0
    %659 = vmatpush2.bf16.msra.mxu0 0
    %660 = vmatprep.subr.bf16.mxu0 0
    %661 = vmatpush2.bf16.msra.mxu0 0
    %662 = vmatprep.subr.bf16.mxu0 0
    %663 = vmatpush2.bf16.msra.mxu0 0
    %664 = vmatprep.subr.bf16.mxu0 0
    %665 = vmatpush2.bf16.msra.mxu0 0
    %666 = vmatprep.mubr.bf16.mxu0 0
    %667 = vmatmul.mubr.bf16.gmra.mxu0 %v562
    %v668 = vpop.f32.mrf.mxu0
    %v669 = vadd.f32 %v584, %v668
    %v670 = vpop.f32.mrf.mxu0
    %v671 = vpop.f32.mrf.mxu0
    %v672 = vpop.f32.mrf.mxu0
    %673 = vdwg.mxu0
    %674 = vst [vmem:[#allocation13] sm:$0xff] %v669
    // Predicated region
    $region46: #{tpu_custom_call.1} parent=1 // pred_check
      _
    $region47: #{tpu_custom_call.1} parent=1 // pred_check_branch
      %676 = sbr.rel (0) target = $region49
    $region48: #{tpu_custom_call.1} parent=1 // pred_region
      %s678 = ssub.s32 128, 128
      %679 = vsyncadd [#allocation7], %s678
      %s681 = sshll.u32 [#allocation13], 4
      %s682 = int_to_ptr.vmem [resolvable:$true] %s681
      %684 = dma.vmem_to_hbm [thread:$0]  %s682, 128, %s7, [#allocation7]
    $region49: #{tpu_custom_call.1} parent=1 // pred_fallthru
      _
    // Predicated region
    $region50: #{tpu_custom_call.1} parent=1 // pred_check
      _
    $region51: #{tpu_custom_call.1} parent=1 // pred_check_branch
      %686 = sbr.rel (0) target = $region53
    $region52: #{tpu_custom_call.1} parent=1 // pred_region
      %s688 = ssub.s32 128, 128
      %689 = vsyncadd [#allocation15], %s688
      %s691 = sshll.u32 [#allocation14], 4
      %s692 = int_to_ptr.vmem [resolvable:$true] %s691
      %694 = dma.vmem_to_hbm [thread:$0]  %s692, 128, %s8, [#allocation15]
    $region53: #{tpu_custom_call.1} parent=1 // pred_fallthru
      _
    // Predicated region
    $region54: #{tpu_custom_call.1} parent=1 // pred_check
      _
    $region55: #{tpu_custom_call.1} parent=1 // pred_check_branch
      %696 = sbr.rel (0) target = $region57
    $region56: #{tpu_custom_call.1} parent=1 // pred_region
      %697 = dma.done [#allocation7], 128
    $region57: #{tpu_custom_call.1} parent=1 // pred_fallthru
      _
    // Predicated region
    $region58: #{tpu_custom_call.1} parent=1 // pred_check
      _
    $region59: #{tpu_custom_call.1} parent=1 // pred_check_branch
      %699 = sbr.rel (0) target = $region61
    $region60: #{tpu_custom_call.1} parent=1 // pred_region
      %700 = dma.done [#allocation15], 128
    $region61: #{tpu_custom_call.1} parent=1 // pred_fallthru
      _
    %701 = vsyncpa [#allocation6], 1
    %702 = vsyncpa [#allocation9], 1
    %703 = vsyncpa [#allocation12], 1
    %704 = vsyncpa [#allocation7], 1
    %705 = vsyncpa [#allocation15], 1

</llo_original>
